<compile_context>
chip_gen: v7x
topology: tpu7x:2x2x1
jax: 0.10.0
libtpu: 0.0.40
codegen_flags: <defaults>
</compile_context>

<pallas_src>
import jax
import jax.numpy as jnp
from jax.experimental import pallas as pl
from jax.experimental.pallas import tpu as pltpu


def graph_conv_kernel(adj_ref, x_ref, wt_ref, br_ref, o_ref):
    """One batch block per grid step.

    adj_ref : (1, R, R)       int8 block-diagonal adjacency (R = BB * N)
    x_ref   : (1, R, D_in)    bf16 node features, batch block flattened to rows
    wt_ref  : (D_in, D_out)   bf16 weight, pre-transposed (shared across steps)
    br_ref  : (1, D_out)      f32 fused bias + root embedding (shared)
    o_ref   : (1, R, D_out)   output block
    """
    # Projection first (reassociated): one MXU pass with M = R rows.
    h = jnp.dot(x_ref[0], wt_ref[...], preferred_element_type=jnp.float32)

    # Aggregation: single block-diagonal matmul (MXU-filling, lane-dense adj).
    # int8 -> f32 upcast is a VPU op that hides under the MXU; h stays f32 for
    # accuracy (extra MXU passes are negligible at these sizes).
    a = adj_ref[0].astype(jnp.float32)
    agg = jnp.dot(a, h, preferred_element_type=jnp.float32)

    # Fused bias + root-embedding broadcast (VPU), cast to the output dtype.
    o_ref[0] = (agg + br_ref[...]).astype(o_ref.dtype)


def _tpu_tuning():
    """Per-generation (vmem_limit_bytes, picker_budget_bytes, mxu_row_target)."""
    kind = ""
    try:
        kind = jax.devices()[0].device_kind.lower()
    except Exception:  # defensive (e.g. AOT on CPU)
        pass
    if "v6" in kind or "v7" in kind:
        # v6e / v7x: 256x256 MXU; 32 MiB scoped-VMEM default (v7x: 64 MiB phys).
        return 32 << 20, 24 << 20, 256
    # v5e and older / unknown: 128x128 MXU, 16 MiB scoped-VMEM default.
    return 16 << 20, 12 << 20, 128


def _pick_batch_block(B, N, D_in, D_out, *, budget_bytes, target_rows, out_itemsize):
    """Number of batch elements folded into one grid step.

    Constraints:
      * >= 2 grid steps whenever B >= 2 (BB <= ceil(B/2)) so the 'parallel'
        grid axis can shard across v7x's two TensorCores.
      * double-buffered blocks + shared operands + f32 temporaries fit budget.
      * stop growing once BB*N reaches the generation's MXU row target.
    """
    if B <= 1:
        return 1
    max_bb = (B + 1) // 2                                   # ceil(B/2)
    best = 1
    for bb in range(1, max_bb + 1):
        r = bb * N
        blocks = 2 * (r * r * 1                             # block-diag adj, int8
                      + r * D_in * 2                        # x, bf16
                      + r * D_out * out_itemsize)           # output block
        shared = 2 * (D_in * D_out * 2 + 8 * 128 * 4)       # W^T + padded bias/root
        temps = r * r * 4 + 2 * r * D_out * 4               # f32 adj upcast, h, agg
        if blocks + shared + temps > budget_bytes:
            break
        best = bb
        if r >= target_rows:
            break
    return best
    # TODO(synk): for N so large a single (N,N) int8 adjacency block exceeds the
    # budget, add node-row tiling of the aggregation; not needed at these shapes.


def graph_conv(x, adj, weight, bias, root_emb, *,
               compute_dtype=jnp.bfloat16,
               adj_storage_dtype=jnp.int8,
               out_dtype=jnp.float32):
    """GraphConv forward.

    x        : [B, N, D_in]   node features
    adj      : [B, N, N]      adjacency (0/1 per the module spec)
    weight   : [D_out, D_in]  nn.Linear weight (PyTorch layout)
    bias     : [D_out]
    root_emb : [1, D_out]     nn.Embedding(1, D_out) table
    returns  : [B, N, D_out]  in out_dtype (default f32; pass bf16 downstream-
                              permitting to halve HBM writeback)
    """
    B, N, D_in = x.shape
    D_out = weight.shape[0]

    vmem_limit, budget, target_rows = _tpu_tuning()
    BB = _pick_batch_block(B, N, D_in, D_out,
                           budget_bytes=budget, target_rows=target_rows,
                           out_itemsize=jnp.dtype(out_dtype).itemsize)
    G = pl.cdiv(B, BB)            # grid steps (>= 2 whenever B >= 2)
    R = BB * N                    # rows per grid step
    B_pad = G * BB

    # Non-divisor batch: zero-pad the tail block (padded rows produce bias+root
    # and are sliced off below).
    if B_pad != B:
        pad = B_pad - B
        x = jnp.pad(x, ((0, pad), (0, 0), (0, 0)))
        adj = jnp.pad(adj, ((0, pad), (0, 0), (0, 0)))

    # Block-diagonal adjacency per batch block, stored narrow (int8) in HBM.
    # Adjacency is 0/1 per the spec; pass adj_storage_dtype=jnp.bfloat16 for
    # weighted graphs.
    adj_blk = adj.astype(adj_storage_dtype).reshape(G, BB, N, N)
    eye_bb = jnp.eye(BB, dtype=adj_storage_dtype)
    adj_bd = (adj_blk[:, :, :, None, :]
              * eye_bb[None, :, None, :, None]).reshape(G, R, R)
    # TODO(synk): for very large N with BB > 1, build the block-diagonal mask
    # in-kernel from broadcasted_iota instead of materializing it in HBM.

    x_c = x.astype(compute_dtype).reshape(G, R, D_in)
    wt_c = weight.T.astype(compute_dtype)                     # (D_in, D_out)
    bias_root = (bias + root_emb[0]).reshape(1, D_out).astype(jnp.float32)

    flops = G * (2 * R * D_in * D_out + 2 * R * R * D_out)
    bytes_accessed = (adj_bd.size * adj_bd.dtype.itemsize
                      + x_c.size * x_c.dtype.itemsize
                      + wt_c.size * wt_c.dtype.itemsize
                      + bias_root.size * 4
                      + G * R * D_out * jnp.dtype(out_dtype).itemsize)

    # Deeper input pipelining only once the grid is long enough for DMA latency
    # to be exposed (large-B mem-bound regime, mostly v5e/v6e).
    stream_kwargs = {"pipeline_mode": pl.Buffered(3)} if G >= 8 else {}

    out = pl.pallas_call(
        graph_conv_kernel,
        out_shape=jax.ShapeDtypeStruct((G, R, D_out), out_dtype),
        grid_spec=pltpu.PrefetchScalarGridSpec(
            num_scalar_prefetch=0,
            grid=(G,),
            in_specs=[
                pl.BlockSpec((1, R, R), lambda g: (g, 0, 0), **stream_kwargs),
                pl.BlockSpec((1, R, D_in), lambda g: (g, 0, 0), **stream_kwargs),
                pl.BlockSpec((D_in, D_out), lambda g: (0, 0)),   # shared W^T
                pl.BlockSpec((1, D_out), lambda g: (0, 0)),      # shared bias+root
            ],
            out_specs=pl.BlockSpec((1, R, D_out), lambda g: (g, 0, 0)),
        ),
        compiler_params=pltpu.CompilerParams(
            dimension_semantics=("parallel",),
            vmem_limit_bytes=vmem_limit,
        ),
        cost_estimate=pl.CostEstimate(
            flops=int(flops),
            transcendentals=0,
            bytes_accessed=int(bytes_accessed),
        ),
    )(adj_bd, x_c, wt_c, bias_root)

    out = out.reshape(B_pad, N, D_out)
    return out[:B] if B_pad != B else out


def graph_conv_ref(x, adj, weight, bias, root_emb):
    """Pure-JAX f32 reference matching the PyTorch forward exactly."""
    out = jnp.einsum("bnm,bmd->bnd", adj, x)
    out = jnp.einsum("bnd,od->bno", out, weight) + bias
    return out + root_emb[0][None, None, :]


if __name__ == "__main__":
    def _run_case(B, N, D_in, D_out, seed):
        key = jax.random.PRNGKey(seed)
        k_x, k_adj, k_w, k_b, k_r = jax.random.split(key, 5)
        x = jax.random.normal(k_x, (B, N, D_in), dtype=jnp.float32)
        adj = (jax.random.uniform(k_adj, (B, N, N)) > 0.5).astype(jnp.float32)
        bound = 1.0 / float(jnp.sqrt(jnp.float32(D_in)))
        weight = jax.random.uniform(k_w, (D_out, D_in), minval=-bound, maxval=bound,
                                    dtype=jnp.float32)
        bias = jax.random.uniform(k_b, (D_out,), minval=-bound, maxval=bound,
                                  dtype=jnp.float32)
        root_emb = jax.random.normal(k_r, (1, D_out), dtype=jnp.float32)

        out = jax.block_until_ready(graph_conv(x, adj, weight, bias, root_emb))
        ref = graph_conv_ref(x, adj, weight, bias, root_emb)
        assert out.shape == (B, N, D_out)
        max_err = float(jnp.max(jnp.abs(out - ref)))
        # bf16 x/W with f32 accumulation vs full-f32 reference.
        assert jnp.allclose(out, ref, atol=2e-1, rtol=2e-2), (
            f"mismatch vs reference (B={B}), max abs err {max_err}")

    # Module spec shapes: batch_size=4, num_nodes=32, d_model=128.
    _run_case(4, 32, 128, 128, seed=0)
    # Non-divisor batch: exercises the pl.cdiv + zero-padded tail-block path.
    _run_case(3, 32, 128, 128, seed=1)

    print("KERNEL_OK")
</pallas_src>

<mosaic_0001>
module attributes {stable_mosaic.version = 11 : i64} {
  func.func @graph_conv_kernel(%arg0: i32, %arg1: memref<1x64x64xi8, #tpu.memory_space<vmem>>, %arg2: memref<1x64x128xbf16, #tpu.memory_space<vmem>>, %arg3: memref<128x128xbf16, #tpu.memory_space<vmem>>, %arg4: memref<1x128xf32, #tpu.memory_space<vmem>>, %arg5: memref<1x64x128xf32, #tpu.memory_space<vmem>>) attributes {dimension_semantics = [#tpu.dimension_semantics<parallel>], iteration_bounds = array<i64: 2>, scalar_prefetch = 0 : i64, scratch_operands = 0 : i64, tpu.core_type = #tpu.core_type<tc>, window_params = [{transform_indices = @transform_0, window_bounds = array<i64: 1, 64, 64>}, {transform_indices = @transform_1, window_bounds = array<i64: 1, 64, 128>}, {pipeline_mode = #tpu.pipeline_mode<synchronous>, transform_indices = @transform_2, window_bounds = array<i64: 128, 128>}, {pipeline_mode = #tpu.pipeline_mode<synchronous>, transform_indices = @transform_3, window_bounds = array<i64: 1, 128>}, {transform_indices = @transform_4, window_bounds = array<i64: 1, 64, 128>}]} {
    %c0 = arith.constant 0 : index
    %c0_0 = arith.constant 0 : index
    %c0_1 = arith.constant 0 : index
    %0 = vector.load %arg2[%c0, %c0_0, %c0_1] : memref<1x64x128xbf16, #tpu.memory_space<vmem>>, vector<1x64x128xbf16>
    %1 = vector.shape_cast %0 : vector<1x64x128xbf16> to vector<64x128xbf16>
    %c0_2 = arith.constant 0 : index
    %c0_3 = arith.constant 0 : index
    %2 = vector.load %arg3[%c0_2, %c0_3] : memref<128x128xbf16, #tpu.memory_space<vmem>>, vector<128x128xbf16>
    %cst = arith.constant dense<0.000000e+00> : vector<64x128xf32>
    %3 = tpu.matmul %1, %2, %cst {dimension_numbers = #tpu.dot_dimension_numbers<[1], [0], [0], [1], [0, 0, 1, 1], [], []>} : vector<64x128xbf16>, vector<128x128xbf16>, vector<64x128xf32> -> vector<64x128xf32>
    %c0_4 = arith.constant 0 : index
    %c0_5 = arith.constant 0 : index
    %c0_6 = arith.constant 0 : index
    %4 = vector.load %arg1[%c0_4, %c0_5, %c0_6] : memref<1x64x64xi8, #tpu.memory_space<vmem>>, vector<1x64x64xi8>
    %5 = vector.shape_cast %4 : vector<1x64x64xi8> to vector<64x64xi8>
    %6 = arith.sitofp %5 : vector<64x64xi8> to vector<64x64xf32>
    %cst_7 = arith.constant dense<0.000000e+00> : vector<64x128xf32>
    %7 = tpu.matmul %6, %3, %cst_7 {dimension_numbers = #tpu.dot_dimension_numbers<[1], [0], [0], [1], [0, 0, 1, 1], [], []>} : vector<64x64xf32>, vector<64x128xf32>, vector<64x128xf32> -> vector<64x128xf32>
    %c0_8 = arith.constant 0 : index
    %c0_9 = arith.constant 0 : index
    %8 = vector.load %arg4[%c0_8, %c0_9] : memref<1x128xf32, #tpu.memory_space<vmem>>, vector<1x128xf32>
    %9 = vector.broadcast %8 : vector<1x128xf32> to vector<64x128xf32>
    %10 = arith.addf %7, %9 : vector<64x128xf32>
    %c0_10 = arith.constant 0 : index
    %c0_11 = arith.constant 0 : index
    %c0_12 = arith.constant 0 : index
    %11 = vector.load %arg5[%c0_10, %c0_11, %c0_12] : memref<1x64x128xf32, #tpu.memory_space<vmem>>, vector<1x64x128xf32>
    %12 = vector.shape_cast %11 : vector<1x64x128xf32> to vector<64x128xf32>
    %13 = vector.shape_cast %10 : vector<64x128xf32> to vector<1x64x128xf32>
    tpu.vector_store %arg5[%c0_10, %c0_11, %c0_12], %13 {strides = array<i32>} : memref<1x64x128xf32, #tpu.memory_space<vmem>>, vector<1x64x128xf32>,
    return
  }
  func.func @transform_0(%arg0: i32) -> (i32, i32, i32) {
    %c0_i32 = arith.constant 0 : i32
    %c0_i32_0 = arith.constant 0 : i32
    %c0_i32_1 = arith.constant 0 : i32
    return %arg0, %c0_i32, %c0_i32_0 : i32, i32, i32
  }
  func.func @transform_1(%arg0: i32) -> (i32, i32, i32) {
    %c0_i32 = arith.constant 0 : i32
    %c0_i32_0 = arith.constant 0 : i32
    %c0_i32_1 = arith.constant 0 : i32
    return %arg0, %c0_i32, %c0_i32_0 : i32, i32, i32
  }
  func.func @transform_2(%arg0: i32) -> (i32, i32) {
    %c0_i32 = arith.constant 0 : i32
    %c0_i32_0 = arith.constant 0 : i32
    %c0_i32_1 = arith.constant 0 : i32
    return %c0_i32, %c0_i32_0 : i32, i32
  }
  func.func @transform_3(%arg0: i32) -> (i32, i32) {
    %c0_i32 = arith.constant 0 : i32
    %c0_i32_0 = arith.constant 0 : i32
    %c0_i32_1 = arith.constant 0 : i32
    return %c0_i32, %c0_i32_0 : i32, i32
  }
  func.func @transform_4(%arg0: i32) -> (i32, i32, i32) {
    %c0_i32 = arith.constant 0 : i32
    %c0_i32_0 = arith.constant 0 : i32
    %c0_i32_1 = arith.constant 0 : i32
    return %arg0, %c0_i32, %c0_i32_0 : i32, i32, i32
  }
}

</mosaic_0001>

<llo_original>
// kernel: tpu_custom_call.1
$region0: #{tpu_custom_call.1}
  #allocation0 [shape = 'u32[]', space=smem, size = 0x4, offset = 0x4, fixed_abs, tag = 'smem constant byte address 0x4 - core index']
  #allocation1 [shape = 'u32[144,128]{1,0:T(1,128)}', space=vmem, size = 0x12000, scoped, tag = 'internal scratch']
  %s0 = inlined_call_operand.hbm [shape: s8[2,64,64], index: 0, kind: input, shape index: {}]
  %s1 = inlined_call_operand.hbm [shape: bf16[2,64,128], index: 1, kind: input, shape index: {}]
  %s2 = inlined_call_operand.hbm [shape: bf16[128,128], index: 2, kind: input, shape index: {}]
  %s3 = inlined_call_operand.vmem [shape: f32[1,128], index: 3, kind: input, shape index: {}]
  %s4 = inlined_call_operand.hbm [shape: f32[2,64,128], index: 4, kind: output, shape index: {}]
  %s5 = sld [smem:[#allocation0]]
  $region61: #{tpu_custom_call.1} parent=0
    _
  %s7 = ssub.s32 1, %s5
  %s8 = scalar_select 0, %s7, %s5
  $region1: #{tpu_custom_call.1} parent=0
    #allocation2 [shape = 'u8[16384]{0}', space=vmem, size = 0x4000, scoped, tag = 'input window, operand 0']
    #allocation3 [shape = 's32[2]{0}', space=sflag, size = 0x8, scoped, tag = 'scoped memory for tpu_custom_call.1']
    #allocation4 [shape = 's32[2]{0}', space=sflag, size = 0x8, scoped, tag = 'scoped memory for tpu_custom_call.1']
    #allocation5 [shape = 'u8[32768]{0}', space=vmem, size = 0x8000, scoped, tag = 'input window, operand 1']
    #allocation6 [shape = 's32[2]{0}', space=sflag, size = 0x8, scoped, tag = 'scoped memory for tpu_custom_call.1']
    #allocation7 [shape = 'u8[32768]{0}', space=vmem, size = 0x8000, scoped, tag = 'input window, operand 2, single buffered']
    #allocation8 [shape = 'u8[65536]{0}', space=vmem, size = 0x10000, scoped, tag = 'output window, operand 0']
    %9 = vsyncpa [#allocation3], 0
    %s10 = scalar_lea.sflag [#allocation3], 1
    %11 = vsyncpa %s10, 0
    %12 = vsyncpa [#allocation6], 0
    %s13 = scalar_lea.sflag [#allocation6], 1
    %14 = vsyncpa %s13, 0
    %15 = vsyncpa [#allocation4], 0
    %s16 = scalar_lea.sflag [#allocation4], 1
    %17 = vsyncpa %s16, 0
    loop: start=0, step=1, limit=4
    $region2: #{tpu_custom_call.1} parent=1 // loop_pre_header
      _
    $region3: #{tpu_custom_call.1} parent=1 // loop_header
      %s19 = sphi 0, %s23
      %p20 = scmp.ge.s32.totalorder %s19, 4
      %s29 = sphi 0, %s31
      %s32 = sphi 0, %s29
      %s33 = sphi 0, %s32
      %s49 = sphi 0, %s33
      %s55 = sphi 0, %s57
      %s58 = sphi 0, %s55
      %s59 = sphi 0, %s58
      %s75 = sphi 0, %s59
      %s79 = sphi 0, %s79
      %s81 = sphi 0, %s79
      %s82 = sphi 0, %s81
      %s96 = sphi 0, %s82
      %s100 = sphi 0, %s100
      %s102 = sphi 0, %s100
      %s103 = sphi 0, %s102
      %s117 = sphi 0, %s103
      %s123 = sphi 0, %s125
      %s126 = sphi 0, %s123
      %s127 = sphi 0, %s126
      %s143 = sphi 0, %s127
    $region4: #{tpu_custom_call.1} parent=1 // loop_header_branch
      %22 = sbr.rel (%p20) target = $region8
    $region5: #{tpu_custom_call.1} parent=1 // loop_body
      %s24 = ssub.s32 %s19, 1
      %s25 = ssub.s32 %s19, 2
      %s26 = sadd.s32 %s19, 1
      %s27 = ssub.s32 %s19, %s26
      %p28 = scmp.eq.s32.totalorder %s27, 0
      %s30 = sadd.s32 %s29, 1
      %s31 = scalar_select %p28, %s29, %s30
      %p34 = pneg %p28
      %p35 = scmp.eq.s32.totalorder %s19, 1
      %p36 = por %p34, %p35
      %p37 = scmp.ne.s32.totalorder %s29, %s32
      %p38 = scmp.eq.s32.totalorder %s19, 0
      %p39 = por %p37, %p38
      %p40 = scmp.ne.s32.totalorder %s29, %s32
      %p41 = scmp.eq.s32.totalorder %s24, 1
      %p42 = por %p40, %p41
      %p43 = scmp.ne.s32.totalorder %s32, %s33
      %p44 = scmp.eq.s32.totalorder %s24, 0
      %p45 = por %p43, %p44
      %p46 = scmp.ne.s32.totalorder %s32, %s33
      %p47 = scmp.eq.s32.totalorder %s25, 1
      %p48 = por %p46, %p47
      %p50 = scmp.ne.s32.totalorder %s33, %s49
      %p51 = scmp.eq.s32.totalorder %s25, 0
      %p52 = por %p50, %p51
      %s53 = ssub.s32 %s19, %s26
      %p54 = scmp.eq.s32.totalorder %s53, 0
      %s56 = sadd.s32 %s55, 1
      %s57 = scalar_select %p54, %s55, %s56
      %p60 = pneg %p54
      %p61 = scmp.eq.s32.totalorder %s19, 1
      %p62 = por %p60, %p61
      %p63 = scmp.ne.s32.totalorder %s55, %s58
      %p64 = scmp.eq.s32.totalorder %s19, 0
      %p65 = por %p63, %p64
      %p66 = scmp.ne.s32.totalorder %s55, %s58
      %p67 = scmp.eq.s32.totalorder %s24, 1
      %p68 = por %p66, %p67
      %p69 = scmp.ne.s32.totalorder %s58, %s59
      %p70 = scmp.eq.s32.totalorder %s24, 0
      %p71 = por %p69, %p70
      %p72 = scmp.ne.s32.totalorder %s58, %s59
      %p73 = scmp.eq.s32.totalorder %s25, 1
      %p74 = por %p72, %p73
      %p76 = scmp.ne.s32.totalorder %s59, %s75
      %p77 = scmp.eq.s32.totalorder %s25, 0
      %p78 = por %p76, %p77
      %s80 = sadd.s32 %s79, 1
      %p83 = scmp.eq.s32.totalorder %s19, 1
      %p84 = scmp.ne.s32.totalorder %s79, %s81
      %p85 = scmp.eq.s32.totalorder %s19, 0
      %p86 = por %p84, %p85
      %p87 = scmp.ne.s32.totalorder %s79, %s81
      %p88 = scmp.eq.s32.totalorder %s24, 1
      %p89 = por %p87, %p88
      %p90 = scmp.ne.s32.totalorder %s81, %s82
      %p91 = scmp.eq.s32.totalorder %s24, 0
      %p92 = por %p90, %p91
      %p93 = scmp.ne.s32.totalorder %s81, %s82
      %p94 = scmp.eq.s32.totalorder %s25, 1
      %p95 = por %p93, %p94
      %p97 = scmp.ne.s32.totalorder %s82, %s96
      %p98 = scmp.eq.s32.totalorder %s25, 0
      %p99 = por %p97, %p98
      %s101 = sadd.s32 %s100, 1
      %p104 = scmp.eq.s32.totalorder %s19, 1
      %p105 = scmp.ne.s32.totalorder %s100, %s102
      %p106 = scmp.eq.s32.totalorder %s19, 0
      %p107 = por %p105, %p106
      %p108 = scmp.ne.s32.totalorder %s100, %s102
      %p109 = scmp.eq.s32.totalorder %s24, 1
      %p110 = por %p108, %p109
      %p111 = scmp.ne.s32.totalorder %s102, %s103
      %p112 = scmp.eq.s32.totalorder %s24, 0
      %p113 = por %p111, %p112
      %p114 = scmp.ne.s32.totalorder %s102, %s103
      %p115 = scmp.eq.s32.totalorder %s25, 1
      %p116 = por %p114, %p115
      %p118 = scmp.ne.s32.totalorder %s103, %s117
      %p119 = scmp.eq.s32.totalorder %s25, 0
      %p120 = por %p118, %p119
      %s121 = ssub.s32 %s19, %s26
      %p122 = scmp.eq.s32.totalorder %s121, 0
      %s124 = sadd.s32 %s123, 1
      %s125 = scalar_select %p122, %s123, %s124
      %p128 = pneg %p122
      %p129 = scmp.eq.s32.totalorder %s19, 1
      %p130 = por %p128, %p129
      %p131 = scmp.ne.s32.totalorder %s123, %s126
      %p132 = scmp.eq.s32.totalorder %s19, 0
      %p133 = por %p131, %p132
      %p134 = scmp.ne.s32.totalorder %s123, %s126
      %p135 = scmp.eq.s32.totalorder %s24, 1
      %p136 = por %p134, %p135
      %p137 = scmp.ne.s32.totalorder %s126, %s127
      %p138 = scmp.eq.s32.totalorder %s24, 0
      %p139 = por %p137, %p138
      %p140 = scmp.ne.s32.totalorder %s126, %s127
      %p141 = scmp.eq.s32.totalorder %s25, 1
      %p142 = por %p140, %p141
      %p144 = scmp.ne.s32.totalorder %s127, %s143
      %p145 = scmp.eq.s32.totalorder %s25, 0
      %p146 = por %p144, %p145
      %p147 = scmp.le.s32.totalorder 1, %s19
      %p148 = scmp.lt.s32.totalorder %s19, 3
      %p149 = pnand %p147, %p148
      %p150 = pneg %p149
      // Predicated region
      $region9: #{tpu_custom_call.1} parent=5 // pred_check
        _
      $region10: #{tpu_custom_call.1} parent=5 // pred_check_branch
        %152 = sbr.rel (%p149) target = $region12
      $region11: #{tpu_custom_call.1} parent=5 // pred_region
        %s153 = ssub.s32 %s19, 1
        // Predicated region
        $region13: #{tpu_custom_call.1} parent=11 // pred_check
          %p154 = pneg %p92
        $region14: #{tpu_custom_call.1} parent=11 // pred_check_branch
          %156 = sbr.rel (%p154) target = $region16
        $region15: #{tpu_custom_call.1} parent=11 // pred_region
          %s158 = ssub.s32 1024, 1024
          %159 = vsyncadd [#allocation6], %s158
          %s160 = sshll.u32 [#allocation7], 4
          %s161 = int_to_ptr.vmem [resolvable:$true] %s160
          %166 = dma.hbm_to_vmem [thread:$0]  %s2, 1024, %s161, [#allocation6], 64, 64, 4
        $region16: #{tpu_custom_call.1} parent=11 // pred_fallthru
          _
        // Predicated region
        $region17: #{tpu_custom_call.1} parent=11 // pred_check
          %p167 = pneg %p113
        $region18: #{tpu_custom_call.1} parent=11 // pred_check_branch
          %169 = sbr.rel (%p167) target = $region20
        $region19: #{tpu_custom_call.1} parent=11 // pred_region
          _
        $region20: #{tpu_custom_call.1} parent=11 // pred_fallthru
          _
      $region12: #{tpu_custom_call.1} parent=5 // pred_fallthru
        _
      %p170 = scmp.lt.s32.totalorder %s19, 2
      // Predicated region
      $region21: #{tpu_custom_call.1} parent=5 // pred_check
        %p171 = pneg %p170
      $region22: #{tpu_custom_call.1} parent=5 // pred_check_branch
        %173 = sbr.rel (%p171) target = $region24
      $region23: #{tpu_custom_call.1} parent=5 // pred_region
        // Predicated region
        $region25: #{tpu_custom_call.1} parent=23 // pred_check
          %p174 = pneg %p39
        $region26: #{tpu_custom_call.1} parent=23 // pred_check_branch
          %176 = sbr.rel (%p174) target = $region28
        $region27: #{tpu_custom_call.1} parent=23 // pred_region
          %s177 = sand.u32 %s29, 1
          %s178 = scalar_lea.sflag [#allocation3], %s177
          %s179 = sand.u32 %s29, 1
          %s180 = smul.addr %s179, 16
          %s181 = scalar_lea.vmem [#allocation2], %s180
          %s183 = ssub.s32 256, 256
          %184 = vsyncadd %s178, %s183
          %s185 = smul.addr %s19, 2
          %s186 = smul.addr %s185, 128
          %s187 = scalar_lea.hbm %s0, %s186
          %s188 = sshll.u32 %s181, 4
          %s189 = int_to_ptr.vmem [resolvable:$true] %s188
          %194 = dma.hbm_to_vmem [thread:$0]  %s187, 256, %s189, %s178, 128, 128, 8
        $region28: #{tpu_custom_call.1} parent=23 // pred_fallthru
          _
        // Predicated region
        $region29: #{tpu_custom_call.1} parent=23 // pred_check
          %p195 = pneg %p65
        $region30: #{tpu_custom_call.1} parent=23 // pred_check_branch
          %197 = sbr.rel (%p195) target = $region32
        $region31: #{tpu_custom_call.1} parent=23 // pred_region
          %s198 = sand.u32 %s19, 1
          %s199 = scalar_lea.sflag [#allocation6], %s198
          %s200 = sand.u32 %s55, 1
          %s201 = smul.addr %s200, 32
          %s202 = scalar_lea.vmem [#allocation5], %s201
          %s204 = ssub.s32 512, 512
          %205 = vsyncadd %s199, %s204
          %s206 = smul.addr %s19, 8
          %s207 = smul.addr %s206, 64
          %s208 = scalar_lea.hbm %s1, %s207
          %s209 = sshll.u32 %s202, 4
          %s210 = int_to_ptr.vmem [resolvable:$true] %s209
          %215 = dma.hbm_to_vmem [thread:$0]  %s208, 512, %s210, %s199, 64, 64, 4
        $region32: #{tpu_custom_call.1} parent=23 // pred_fallthru
          _
      $region24: #{tpu_custom_call.1} parent=5 // pred_fallthru
        _
      %p216 = scmp.le.s32.totalorder 1, %s19
      %p217 = scmp.lt.s32.totalorder %s19, 3
      %p218 = pnand %p216, %p217
      %p219 = pneg %p218
      // Predicated region
      $region33: #{tpu_custom_call.1} parent=5 // pred_check
        _
      $region34: #{tpu_custom_call.1} parent=5 // pred_check_branch
        %221 = sbr.rel (%p218) target = $region36
      $region35: #{tpu_custom_call.1} parent=5 // pred_region
        %s222 = ssub.s32 %s19, 1
        %s223 = sand.u32 %s32, 1
        %s224 = scalar_lea.sflag [#allocation3], %s223
        %s225 = sand.u32 %s32, 1
        %s226 = smul.addr %s225, 16
        %s227 = scalar_lea.vmem [#allocation2], %s226
        // Predicated region
        $region37: #{tpu_custom_call.1} parent=35 // pred_check
          %p228 = pneg %p45
        $region38: #{tpu_custom_call.1} parent=35 // pred_check_branch
          %230 = sbr.rel (%p228) target = $region40
        $region39: #{tpu_custom_call.1} parent=35 // pred_region
          %231 = dma.done %s224, 256
        $region40: #{tpu_custom_call.1} parent=35 // pred_fallthru
          _
        %s232 = sand.u32 %s24, 1
        %s233 = scalar_lea.sflag [#allocation6], %s232
        %s234 = sand.u32 %s58, 1
        %s235 = smul.addr %s234, 32
        %s236 = scalar_lea.vmem [#allocation5], %s235
        // Predicated region
        $region41: #{tpu_custom_call.1} parent=35 // pred_check
          %p237 = pneg %p71
        $region42: #{tpu_custom_call.1} parent=35 // pred_check_branch
          %239 = sbr.rel (%p237) target = $region44
        $region43: #{tpu_custom_call.1} parent=35 // pred_region
          %240 = dma.done %s233, 512
        $region44: #{tpu_custom_call.1} parent=35 // pred_fallthru
          _
        // Predicated region
        $region45: #{tpu_custom_call.1} parent=35 // pred_check
          %p241 = pneg %p92
        $region46: #{tpu_custom_call.1} parent=35 // pred_check_branch
          %243 = sbr.rel (%p241) target = $region48
        $region47: #{tpu_custom_call.1} parent=35 // pred_region
          %244 = dma.done [#allocation6], 1024
        $region48: #{tpu_custom_call.1} parent=35 // pred_fallthru
          _
        %s245 = sand.u32 %s32, 1
        %s246 = scalar_lea.sflag [#allocation3], %s245
        %s247 = sand.u32 %s32, 1
        %s248 = smul.addr %s247, 16
        %s249 = scalar_lea.vmem [#allocation2], %s248
        %p250 = pneg %p45
        %p251 = pneg %p42
        %s252 = sand.u32 %s24, 1
        %s253 = scalar_lea.sflag [#allocation6], %s252
        %s254 = sand.u32 %s58, 1
        %s255 = smul.addr %s254, 32
        %s256 = scalar_lea.vmem [#allocation5], %s255
        %p257 = pneg %p71
        %p258 = pneg %p68
        %p259 = pneg %p92
        %p260 = pneg %p89
        %p261 = pneg %p113
        %p262 = pneg %p110
        %p263 = pneg %p139
        %p264 = pneg %p136
        %s265 = sand.u32 %s126, 1
        %s266 = scalar_lea.sflag [#allocation4], %s265
        %s267 = sand.u32 %s126, 1
        %s268 = smul.addr %s267, 64
        %s269 = scalar_lea.vmem [#allocation8], %s268
        %v271 = vld [vmem:[%s236] sm:$0xf]
        %v272 = vld [vmem:[%s236 + $0x4] sm:$0xf]
        %v273 = vld [vmem:[%s236 + $0x8] sm:$0xf]
        %v274 = vld [vmem:[%s236 + $0xc] sm:$0xf]
        %v275 = vld [vmem:[%s236 + $0x10] sm:$0xf]
        %v276 = vld [vmem:[%s236 + $0x14] sm:$0xf]
        %v277 = vld [vmem:[%s236 + $0x18] sm:$0xf]
        %v278 = vld [vmem:[%s236 + $0x1c] sm:$0xf]
        %v279 = vld [vmem:[#allocation7] sm:$0xf]
        %v280 = vld [vmem:[#allocation7 + $0x4] sm:$0xf]
        %v281 = vld [vmem:[#allocation7 + $0x8] sm:$0xf]
        %v282 = vld [vmem:[#allocation7 + $0xc] sm:$0xf]
        %v283 = vld [vmem:[#allocation7 + $0x10] sm:$0xf]
        %v284 = vld [vmem:[#allocation7 + $0x14] sm:$0xf]
        %v285 = vld [vmem:[#allocation7 + $0x18] sm:$0xf]
        %v286 = vld [vmem:[#allocation7 + $0x1c] sm:$0xf]
        %v287 = vld [vmem:[#allocation7 + $0x20] sm:$0xf]
        %v288 = vld [vmem:[#allocation7 + $0x24] sm:$0xf]
        %v289 = vld [vmem:[#allocation7 + $0x28] sm:$0xf]
        %v290 = vld [vmem:[#allocation7 + $0x2c] sm:$0xf]
        %v291 = vld [vmem:[#allocation7 + $0x30] sm:$0xf]
        %v292 = vld [vmem:[#allocation7 + $0x34] sm:$0xf]
        %v293 = vld [vmem:[#allocation7 + $0x38] sm:$0xf]
        %v294 = vld [vmem:[#allocation7 + $0x3c] sm:$0xf]
        %v303 = vunpack.c.l.b16 %v271
        %v304 = vunpack.c.l.b16 %v272
        %v305 = vunpack.c.l.b16 %v273
        %v306 = vunpack.c.l.b16 %v274
        %v307 = vunpack.c.l.b16 %v275
        %v308 = vunpack.c.l.b16 %v276
        %v309 = vunpack.c.l.b16 %v277
        %v310 = vunpack.c.l.b16 %v278
        %v311 = vpack.c.b16 %v304, %v303
        %v312 = vpack.c.b16 %v306, %v305
        %v313 = vpack.c.b16 %v308, %v307
        %v314 = vpack.c.b16 %v310, %v309
        %v335 = vunpack.c.l.b16 %v279
        %v336 = vunpack.c.l.b16 %v280
        %v337 = vunpack.c.l.b16 %v281
        %v338 = vunpack.c.l.b16 %v282
        %v339 = vunpack.c.l.b16 %v283
        %v340 = vunpack.c.l.b16 %v284
        %v341 = vunpack.c.l.b16 %v285
        %v342 = vunpack.c.l.b16 %v286
        %v343 = vunpack.c.l.b16 %v287
        %v344 = vunpack.c.l.b16 %v288
        %v345 = vunpack.c.l.b16 %v289
        %v346 = vunpack.c.l.b16 %v290
        %v347 = vunpack.c.l.b16 %v291
        %v348 = vunpack.c.l.b16 %v292
        %v349 = vunpack.c.l.b16 %v293
        %v350 = vunpack.c.l.b16 %v294
        %v351 = vpack.c.b16 %v336, %v335
        %v352 = vpack.c.b16 %v338, %v337
        %v353 = vpack.c.b16 %v340, %v339
        %v354 = vpack.c.b16 %v342, %v341
        %v355 = vpack.c.b16 %v344, %v343
        %v356 = vpack.c.b16 %v346, %v345
        %v357 = vpack.c.b16 %v348, %v347
        %v358 = vpack.c.b16 %v350, %v349
        %367 = vmatprep.subr.bf16.mxu0 0
        %368 = vmatpush1.bf16.msra.mxu0 %v351
        %369 = vmatprep.subr.bf16.mxu0 0
        %370 = vmatpush1.bf16.msra.mxu0 %v352
        %371 = vmatprep.subr.bf16.mxu0 0
        %372 = vmatpush1.bf16.msra.mxu0 %v353
        %373 = vmatprep.subr.bf16.mxu0 0
        %374 = vmatpush1.bf16.msra.mxu0 %v354
        %375 = vmatprep.subr.bf16.mxu0 0
        %376 = vmatpush1.bf16.msra.mxu0 %v355
        %377 = vmatprep.subr.bf16.mxu0 0
        %378 = vmatpush1.bf16.msra.mxu0 %v356
        %379 = vmatprep.subr.bf16.mxu0 0
        %380 = vmatpush1.bf16.msra.mxu0 %v357
        %381 = vmatprep.subr.bf16.mxu0 0
        %382 = vmatpush1.bf16.msra.mxu0 %v358
        %383 = vmatprep.subr.bf16.mxu0 0
        %384 = vmatpush1.bf16.msra.mxu0 0
        %385 = vmatprep.subr.bf16.mxu0 0
        %386 = vmatpush1.bf16.msra.mxu0 0
        %387 = vmatprep.subr.bf16.mxu0 0
        %388 = vmatpush1.bf16.msra.mxu0 0
        %389 = vmatprep.subr.bf16.mxu0 0
        %390 = vmatpush1.bf16.msra.mxu0 0
        %391 = vmatprep.subr.bf16.mxu0 0
        %392 = vmatpush1.bf16.msra.mxu0 0
        %393 = vmatprep.subr.bf16.mxu0 0
        %394 = vmatpush1.bf16.msra.mxu0 0
        %395 = vmatprep.subr.bf16.mxu0 0
        %396 = vmatpush1.bf16.msra.mxu0 0
        %397 = vmatprep.subr.bf16.mxu0 0
        %398 = vmatpush1.bf16.msra.mxu0 0
        %399 = vmatprep.mubr.bf16.mxu0 0
        %400 = vmatmul.mubr.bf16.gmra.mrb[0].mxu0 %v311
        %v401 = vpop.f32.mrb[0].mxu0
        %v402 = vadd.f32 0.0, %v401
        %v403 = vpop.f32.mrb[0].mxu0
        %v404 = vpop.f32.mrb[0].mxu0
        %v405 = vadd.f32 0.0, %v404
        %v406 = vpop.f32.mrb[0].mxu0
        %407 = vmatprep.mubr.bf16.mxu0 0
        %408 = vmatmul.mubr.bf16.gmra.mrb[0].mxu0 %v312
        %v409 = vpop.f32.mrb[0].mxu0
        %v410 = vadd.f32 0.0, %v409
        %v411 = vpop.f32.mrb[0].mxu0
        %v412 = vpop.f32.mrb[0].mxu0
        %v413 = vadd.f32 0.0, %v412
        %v414 = vpop.f32.mrb[0].mxu0
        %415 = vmatprep.mubr.bf16.mxu0 0
        %416 = vmatmul.mubr.bf16.gmra.mrb[0].mxu0 %v313
        %v417 = vpop.f32.mrb[0].mxu0
        %v418 = vadd.f32 0.0, %v417
        %v419 = vpop.f32.mrb[0].mxu0
        %v420 = vpop.f32.mrb[0].mxu0
        %v421 = vadd.f32 0.0, %v420
        %v422 = vpop.f32.mrb[0].mxu0
        %423 = vmatprep.mubr.bf16.mxu0 0
        %424 = vmatmul.mubr.bf16.gmra.mrb[0].mxu0 %v314
        %v425 = vpop.f32.mrb[0].mxu0
        %v426 = vadd.f32 0.0, %v425
        %v427 = vpop.f32.mrb[0].mxu0
        %v428 = vpop.f32.mrb[0].mxu0
        %v429 = vadd.f32 0.0, %v428
        %v430 = vpop.f32.mrb[0].mxu0
        %431 = vdwg.mxu0
        %v432 = vld [vmem:[%s227] sm:$0xff]
        %v433 = vld [vmem:[%s227 + $0x8] sm:$0xff]
        %v434 = vunpack.c.0.s8 %v432
        %v435 = vunpack.c.1.s8 %v432
        %v436 = vunpack.c.2.s8 %v432
        %v437 = vunpack.c.3.s8 %v432
        %v438 = vunpack.c.0.s8 %v433
        %v439 = vunpack.c.1.s8 %v433
        %v440 = vunpack.c.2.s8 %v433
        %v441 = vunpack.c.3.s8 %v433
        %v442 = vcvt.s32.f32 %v434
        %v443 = vcvt.s32.f32 %v435
        %v444 = vcvt.s32.f32 %v436
        %v445 = vcvt.s32.f32 %v437
        %v446 = vcvt.s32.f32 %v438
        %v447 = vcvt.s32.f32 %v439
        %v448 = vcvt.s32.f32 %v440
        %v449 = vcvt.s32.f32 %v441
        %v450 = vld [vmem:[%s3] sm:$0x1]
        %v452 = vlaneseq
        %v453 = vshrl.u32 %v452, 7
        %v454 = vsub.s32 0, %v453
        %v455 = vrot.slane %v450, %v454
        %vm457 = vcmask 523264
        %v459 = vsel %vm457, %v442, 0
        %v462 = vsel %vm457, %v443, 0
        %v465 = vsel %vm457, %v444, 0
        %v468 = vsel %vm457, %v445, 0
        %v471 = vsel %vm457, %v446, 0
        %v474 = vsel %vm457, %v447, 0
        %v477 = vsel %vm457, %v448, 0
        %v480 = vsel %vm457, %v449, 0
        %482 = vmatprep.subr.mxu0 0.0
        %483 = vmatpush1.msra.mxu0 %v402
        %484 = vmatprep.subr.mxu0 0.0
        %485 = vmatpush1.msra.mxu0 %v405
        %486 = vmatprep.subr.mxu0 0.0
        %487 = vmatpush1.msra.mxu0 %v410
        %488 = vmatprep.subr.mxu0 0.0
        %489 = vmatpush1.msra.mxu0 %v413
        %490 = vmatprep.subr.mxu0 0.0
        %491 = vmatpush1.msra.mxu0 %v418
        %492 = vmatprep.subr.mxu0 0.0
        %493 = vmatpush1.msra.mxu0 %v421
        %494 = vmatprep.subr.mxu0 0.0
        %495 = vmatpush1.msra.mxu0 %v426
        %496 = vmatprep.subr.mxu0 0.0
        %497 = vmatpush1.msra.mxu0 %v429
        %498 = vmatprep.subr.mxu0 0.0
        %499 = vmatpush1.msra.mxu0 0.0
        %500 = vmatprep.subr.mxu0 0.0
        %501 = vmatpush1.msra.mxu0 0.0
        %502 = vmatprep.subr.mxu0 0.0
        %503 = vmatpush1.msra.mxu0 0.0
        %504 = vmatprep.subr.mxu0 0.0
        %505 = vmatpush1.msra.mxu0 0.0
        %506 = vmatprep.subr.mxu0 0.0
        %507 = vmatpush1.msra.mxu0 0.0
        %508 = vmatprep.subr.mxu0 0.0
        %509 = vmatpush1.msra.mxu0 0.0
        %510 = vmatprep.subr.mxu0 0.0
        %511 = vmatpush1.msra.mxu0 0.0
        %512 = vmatprep.subr.mxu0 0.0
        %513 = vmatpush1.msra.mxu0 0.0
        %514 = vmatprep.subr.mxu0 0.0
        %515 = vmatpush1.msra.mxu0 0.0
        %516 = vmatprep.subr.mxu0 0.0
        %517 = vmatpush1.msra.mxu0 0.0
        %518 = vmatprep.subr.mxu0 0.0
        %519 = vmatpush1.msra.mxu0 0.0
        %520 = vmatprep.subr.mxu0 0.0
        %521 = vmatpush1.msra.mxu0 0.0
        %522 = vmatprep.subr.mxu0 0.0
        %523 = vmatpush1.msra.mxu0 0.0
        %524 = vmatprep.subr.mxu0 0.0
        %525 = vmatpush1.msra.mxu0 0.0
        %526 = vmatprep.subr.mxu0 0.0
        %527 = vmatpush1.msra.mxu0 0.0
        %528 = vmatprep.subr.mxu0 0.0
        %529 = vmatpush1.msra.mxu0 0.0
        %530 = vmatprep.subr.mxu0 0.0
        %531 = vmatpush1.msra.mxu0 0.0
        %532 = vmatprep.subr.mxu0 0.0
        %533 = vmatpush1.msra.mxu0 0.0
        %534 = vmatprep.subr.mxu0 0.0
        %535 = vmatpush1.msra.mxu0 0.0
        %536 = vmatprep.subr.mxu0 0.0
        %537 = vmatpush1.msra.mxu0 0.0
        %538 = vmatprep.subr.mxu0 0.0
        %539 = vmatpush1.msra.mxu0 0.0
        %540 = vmatprep.subr.mxu0 0.0
        %541 = vmatpush1.msra.mxu0 0.0
        %542 = vmatprep.subr.mxu0 0.0
        %543 = vmatpush1.msra.mxu0 0.0
        %544 = vmatprep.subr.mxu0 0.0
        %545 = vmatpush1.msra.mxu0 0.0
        %546 = vmatprep.mubr.f32.mxu0 0.0
        %547 = vmatmul.mubr.f32.gmra.mrb[0].mxu0 %v459
        %v548 = vpop.f32.mrb[0].mxu0
        %v549 = vadd.f32 %v455, %v548
        %v550 = vpop.f32.mrb[0].mxu0
        %551 = vmatprep.mubr.f32.mxu0 0.0
        %552 = vmatmul.mubr.f32.gmra.mrb[0].mxu0 %v462
        %v553 = vpop.f32.mrb[0].mxu0
        %v554 = vadd.f32 %v455, %v553
        %v555 = vpop.f32.mrb[0].mxu0
        %556 = vmatprep.mubr.f32.mxu0 0.0
        %557 = vmatmul.mubr.f32.gmra.mrb[0].mxu0 %v465
        %v558 = vpop.f32.mrb[0].mxu0
        %v559 = vadd.f32 %v455, %v558
        %v560 = vpop.f32.mrb[0].mxu0
        %561 = vmatprep.mubr.f32.mxu0 0.0
        %562 = vmatmul.mubr.f32.gmra.mrb[0].mxu0 %v468
        %v563 = vpop.f32.mrb[0].mxu0
        %v564 = vadd.f32 %v455, %v563
        %v565 = vpop.f32.mrb[0].mxu0
        %566 = vmatprep.mubr.f32.mxu0 0.0
        %567 = vmatmul.mubr.f32.gmra.mrb[0].mxu0 %v471
        %v568 = vpop.f32.mrb[0].mxu0
        %v569 = vadd.f32 %v455, %v568
        %v570 = vpop.f32.mrb[0].mxu0
        %571 = vmatprep.mubr.f32.mxu0 0.0
        %572 = vmatmul.mubr.f32.gmra.mrb[0].mxu0 %v474
        %v573 = vpop.f32.mrb[0].mxu0
        %v574 = vadd.f32 %v455, %v573
        %v575 = vpop.f32.mrb[0].mxu0
        %576 = vmatprep.mubr.f32.mxu0 0.0
        %577 = vmatmul.mubr.f32.gmra.mrb[0].mxu0 %v477
        %v578 = vpop.f32.mrb[0].mxu0
        %v579 = vadd.f32 %v455, %v578
        %v580 = vpop.f32.mrb[0].mxu0
        %581 = vmatprep.mubr.f32.mxu0 0.0
        %582 = vmatmul.mubr.f32.gmra.mrb[0].mxu0 %v480
        %v583 = vpop.f32.mrb[0].mxu0
        %v584 = vadd.f32 %v455, %v583
        %v585 = vpop.f32.mrb[0].mxu0
        %586 = vdwg.mxu0
        %587 = vst [vmem:[%s269] sm:$0xff] %v549
        %588 = vst [vmem:[%s269 + $0x8] sm:$0xff] %v554
        %589 = vst [vmem:[%s269 + $0x10] sm:$0xff] %v559
        %590 = vst [vmem:[%s269 + $0x18] sm:$0xff] %v564
        %591 = vst [vmem:[%s269 + $0x20] sm:$0xff] %v569
        %592 = vst [vmem:[%s269 + $0x28] sm:$0xff] %v574
        %593 = vst [vmem:[%s269 + $0x30] sm:$0xff] %v579
        %594 = vst [vmem:[%s269 + $0x38] sm:$0xff] %v584
        %s595 = sand.u32 %s126, 1
        %s596 = scalar_lea.sflag [#allocation4], %s595
        %s597 = sand.u32 %s126, 1
        %s598 = smul.addr %s597, 64
        %s599 = scalar_lea.vmem [#allocation8], %s598
        // Predicated region
        $region49: #{tpu_custom_call.1} parent=35 // pred_check
          %p600 = pneg %p136
        $region50: #{tpu_custom_call.1} parent=35 // pred_check_branch
          %602 = sbr.rel (%p600) target = $region52
        $region51: #{tpu_custom_call.1} parent=35 // pred_region
          %s604 = ssub.s32 1024, 1024
          %605 = vsyncadd %s596, %s604
          %s606 = smul.addr %s24, 8
          %s607 = smul.addr %s606, 128
          %s608 = scalar_lea.hbm %s4, %s607
          %s609 = sshll.u32 %s599, 4
          %s610 = int_to_ptr.vmem [resolvable:$true] %s609
          %615 = dma.vmem_to_hbm [thread:$0]  %s610, 1024, %s608, %s596, 128, 128, 8
        $region52: #{tpu_custom_call.1} parent=35 // pred_fallthru
          _
      $region36: #{tpu_custom_call.1} parent=5 // pred_fallthru
        _
      %p616 = scmp.le.s32.totalorder 2, %s19
      // Predicated region
      $region53: #{tpu_custom_call.1} parent=5 // pred_check
        %p617 = pneg %p616
      $region54: #{tpu_custom_call.1} parent=5 // pred_check_branch
        %619 = sbr.rel (%p617) target = $region56
      $region55: #{tpu_custom_call.1} parent=5 // pred_region
        %s620 = ssub.s32 %s19, 2
        // Predicated region
        $region57: #{tpu_custom_call.1} parent=55 // pred_check
          %p621 = pneg %p142
        $region58: #{tpu_custom_call.1} parent=55 // pred_check_branch
          %623 = sbr.rel (%p621) target = $region60
        $region59: #{tpu_custom_call.1} parent=55 // pred_region
          %s624 = sand.u32 %s127, 1
          %s625 = scalar_lea.sflag [#allocation4], %s624
          %s626 = sand.u32 %s127, 1
          %s627 = smul.addr %s626, 64
          %s628 = scalar_lea.vmem [#allocation8], %s627
          %629 = dma.done %s625, 1024
        $region60: #{tpu_custom_call.1} parent=55 // pred_fallthru
          _
      $region56: #{tpu_custom_call.1} parent=5 // pred_fallthru
        _
    $region6: #{tpu_custom_call.1} parent=1 // loop_footer
      %s23 = sadd.s32 1, %s19
    $region7: #{tpu_custom_call.1} parent=1 // loop_footer_branch
      %18 = sbr.rel target = $region3
    $region8: #{tpu_custom_call.1} parent=1 // loop_exit
      _
    %630 = vsyncpa [#allocation3], 1
    %s631 = scalar_lea.sflag [#allocation3], 1
    %632 = vsyncpa %s631, 1
    %633 = vsyncpa [#allocation6], 1
    %s634 = scalar_lea.sflag [#allocation6], 1
    %635 = vsyncpa %s634, 1
    %636 = vsyncpa [#allocation4], 1
    %s637 = scalar_lea.sflag [#allocation4], 1
    %638 = vsyncpa %s637, 1

</llo_original>
